<compile_context>
chip_gen: v7x
topology: tpu7x:2x2x1
jax: 0.10.0
libtpu: 0.0.40
codegen_flags: <defaults>
</compile_context>

<pallas_src>
from functools import partial
import math

import jax
import jax.numpy as jnp
from jax.experimental import pallas as pl
from jax.experimental.pallas import tpu as pltpu


def _rmse_kernel(yhat_ref, y_ref, o_ref, *, eps, inv_n, n, tn, mask_last):
    # yhat_ref / y_ref: (TB, TN) input tiles.
    # o_ref: (1, 1, TB) lane-dense output row, resident across the k axis.
    k = pl.program_id(1)

    @pl.when(k == 0)
    def _init():
        o_ref[...] = jnp.zeros_like(o_ref)

    d = yhat_ref[...].astype(jnp.float32) - y_ref[...].astype(jnp.float32)
    sq = d * d
    if mask_last:
        # Only emitted when N is not a multiple of TN: zero out the
        # out-of-range lanes of the (partial) last k block.
        lane = jax.lax.broadcasted_iota(jnp.int32, sq.shape, dimension=1)
        sq = jnp.where(k * tn + lane < n, sq, 0.0)

    o_ref[0, 0, :] += jnp.sum(sq, axis=-1)

    @pl.when(k == pl.num_programs(1) - 1)
    def _finish():
        o_ref[0, 0, :] = jnp.sqrt(o_ref[0, 0, :] * inv_n + eps)


def _choose_tiles(bc: int, n: int, itemsize: int) -> tuple[int, int]:
    """Pick (rows_per_block, lanes_per_block) targeting ~2 MiB input blocks."""
    target_block_bytes = 2 * 1024 * 1024
    max_elems = max(1, target_block_bytes // itemsize)
    if 8 * n <= max_elems:
        # Whole rows fit: single k step, as many rows per block as reasonable.
        tn = n
        tb = min(512, max(8, (max_elems // max(n, 1)) // 8 * 8))
    else:
        # Rows are huge: tile the reduced axis too (multiple of 128 lanes).
        tb = 8
        tn = max(128, (max_elems // tb) // 128 * 128)
    if tb >= bc:
        # Block covers the full row dim -> always legal, no partial row block.
        tb = bc
    return tb, tn


def rmse_loss(yhat: jax.Array, y: jax.Array, eps: float = 1e-6) -> jax.Array:
    """Pallas equivalent of RMSELoss.forward(yhat, y)."""
    assert yhat.shape == y.shape, "yhat and y must have identical shapes"
    *lead, H, W = yhat.shape
    bc = math.prod(lead) if lead else 1
    n = H * W

    # Lane-dense 2D view: reduced axis (H*W) is the minor dimension.
    # (Row-major reshape, no copy.)
    yh = yhat.reshape(bc, n)
    yr = y.reshape(bc, n)

    itemsize = jnp.dtype(yhat.dtype).itemsize
    tb, tn = _choose_tiles(bc, n, itemsize)
    grid_rows = pl.cdiv(bc, tb)
    grid_k = pl.cdiv(n, tn)
    mask_last = (n % tn) != 0

    out = pl.pallas_call(
        partial(
            _rmse_kernel,
            eps=float(eps),
            inv_n=1.0 / float(n),
            n=n,
            tn=tn,
            mask_last=mask_last,
        ),
        out_shape=jax.ShapeDtypeStruct((grid_rows, 1, tb), jnp.float32),
        grid=(grid_rows, grid_k),
        in_specs=[
            pl.BlockSpec((tb, tn), lambda i, k: (i, k)),
            pl.BlockSpec((tb, tn), lambda i, k: (i, k)),
        ],
        out_specs=pl.BlockSpec((1, 1, tb), lambda i, k: (i, 0, 0)),
        compiler_params=pltpu.CompilerParams(
            dimension_semantics=("parallel", "arbitrary"),
            vmem_limit_bytes=32 * 1024 * 1024,
        ),
    )(yh, yr)

    out = out.reshape(grid_rows * tb)[:bc]
    return out.reshape(tuple(lead)) if lead else out.reshape(())


def _rmse_ref(yhat, y, eps=1e-6):
    return jnp.sqrt(jnp.mean(jnp.square(yhat - y) + eps, axis=(-1, -2)))


if __name__ == "__main__":
    key = jax.random.PRNGKey(0)
    k1, k2 = jax.random.split(key)

    # Small NCHW inputs consistent with the module's usage.
    B, C, H, W = 2, 4, 16, 16
    yhat = jax.random.normal(k1, (B, C, H, W), dtype=jnp.float32)
    y = jax.random.normal(k2, (B, C, H, W), dtype=jnp.float32)

    loss = rmse_loss(yhat, y, eps=1e-6)
    loss = jax.block_until_ready(loss)

    ref = _rmse_ref(yhat, y, eps=1e-6)
    assert loss.shape == (B, C), f"bad output shape {loss.shape}"
    assert jnp.allclose(loss, ref, atol=1e-5, rtol=1e-5), "mismatch vs reference"

    print("KERNEL_OK")
</pallas_src>

<mosaic_0001>
module attributes {stable_mosaic.version = 11 : i64} {
  func.func @_rmse_kernel(%arg0: i32, %arg1: i32, %arg2: memref<8x256xf32, #tpu.memory_space<vmem>>, %arg3: memref<8x256xf32, #tpu.memory_space<vmem>>, %arg4: memref<1x1x8xf32, #tpu.memory_space<vmem>>) attributes {dimension_semantics = [#tpu.dimension_semantics<parallel>, #tpu.dimension_semantics<arbitrary>], iteration_bounds = array<i64: 1, 1>, scalar_prefetch = 0 : i64, scratch_operands = 0 : i64, tpu.core_type = #tpu.core_type<tc>, window_params = [{transform_indices = @transform_0, window_bounds = array<i64: 8, 256>}, {transform_indices = @transform_1, window_bounds = array<i64: 8, 256>}, {transform_indices = @transform_2, window_bounds = array<i64: 1, 1, 8>}]} {
    %c0_i32 = arith.constant 0 : i32
    %0 = arith.cmpi eq, %arg1, %c0_i32 : i32
    %1 = arith.extui %0 : i1 to i32
    %c0_i32_0 = arith.constant 0 : i32
    %2 = arith.cmpi ne, %1, %c0_i32_0 : i32
    scf.if %2 {
      %cst_12 = arith.constant 0.000000e+00 : f32
      %17 = vector.broadcast %cst_12 : f32 to vector<1x1x8xf32>
      %c0_13 = arith.constant 0 : index
      %c0_14 = arith.constant 0 : index
      %c0_15 = arith.constant 0 : index
      %18 = vector.load %arg4[%c0_13, %c0_14, %c0_15] : memref<1x1x8xf32, #tpu.memory_space<vmem>>, vector<1x1x8xf32>
      tpu.vector_store %arg4[%c0_13, %c0_14, %c0_15], %17 {strides = array<i32>} : memref<1x1x8xf32, #tpu.memory_space<vmem>>, vector<1x1x8xf32>,
    } else {
    }
    %c0 = arith.constant 0 : index
    %c0_1 = arith.constant 0 : index
    %3 = vector.load %arg2[%c0, %c0_1] : memref<8x256xf32, #tpu.memory_space<vmem>>, vector<8x256xf32>
    %c0_2 = arith.constant 0 : index
    %c0_3 = arith.constant 0 : index
    %4 = vector.load %arg3[%c0_2, %c0_3] : memref<8x256xf32, #tpu.memory_space<vmem>>, vector<8x256xf32>
    %5 = arith.subf %3, %4 : vector<8x256xf32>
    %6 = arith.mulf %5, %5 : vector<8x256xf32>
    %c0_4 = arith.constant 0 : index
    %c0_5 = arith.constant 0 : index
    %c0_6 = arith.constant 0 : index
    %7 = vector.load %arg4[%c0_4, %c0_5, %c0_6] : memref<1x1x8xf32, #tpu.memory_space<vmem>>, vector<1x1x8xf32>
    %8 = vector.shape_cast %7 : vector<1x1x8xf32> to vector<8xf32>
    %cst = arith.constant dense<0.000000e+00> : vector<8xf32>
    %9 = vector.multi_reduction <add>, %6, %cst [1] : vector<8x256xf32> to vector<8xf32>
    %10 = arith.addf %8, %9 : vector<8xf32>
    %c0_7 = arith.constant 0 : index
    %c0_8 = arith.constant 0 : index
    %c0_9 = arith.constant 0 : index
    %11 = vector.load %arg4[%c0_7, %c0_8, %c0_9] : memref<1x1x8xf32, #tpu.memory_space<vmem>>, vector<1x1x8xf32>
    %12 = vector.shape_cast %11 : vector<1x1x8xf32> to vector<8xf32>
    %13 = vector.shape_cast %10 : vector<8xf32> to vector<1x1x8xf32>
    tpu.vector_store %arg4[%c0_7, %c0_8, %c0_9], %13 {strides = array<i32>} : memref<1x1x8xf32, #tpu.memory_space<vmem>>, vector<1x1x8xf32>,
    %c0_i32_10 = arith.constant 0 : i32
    %14 = arith.cmpi eq, %arg1, %c0_i32_10 : i32
    %15 = arith.extui %14 : i1 to i32
    %c0_i32_11 = arith.constant 0 : i32
    %16 = arith.cmpi ne, %15, %c0_i32_11 : i32
    scf.if %16 {
      %c0_12 = arith.constant 0 : index
      %c0_13 = arith.constant 0 : index
      %c0_14 = arith.constant 0 : index
      %17 = vector.load %arg4[%c0_12, %c0_13, %c0_14] : memref<1x1x8xf32, #tpu.memory_space<vmem>>, vector<1x1x8xf32>
      %18 = vector.shape_cast %17 : vector<1x1x8xf32> to vector<8xf32>
      %cst_15 = arith.constant 3.906250e-03 : f32
      %19 = vector.broadcast %cst_15 : f32 to vector<8xf32>
      %20 = arith.mulf %18, %19 : vector<8xf32>
      %cst_16 = arith.constant 9.99999997E-7 : f32
      %21 = vector.broadcast %cst_16 : f32 to vector<8xf32>
      %22 = arith.addf %20, %21 : vector<8xf32>
      %23 = math.sqrt %22 : vector<8xf32>
      %c0_17 = arith.constant 0 : index
      %c0_18 = arith.constant 0 : index
      %c0_19 = arith.constant 0 : index
      %24 = vector.load %arg4[%c0_17, %c0_18, %c0_19] : memref<1x1x8xf32, #tpu.memory_space<vmem>>, vector<1x1x8xf32>
      %25 = vector.shape_cast %24 : vector<1x1x8xf32> to vector<8xf32>
      %26 = vector.shape_cast %23 : vector<8xf32> to vector<1x1x8xf32>
      tpu.vector_store %arg4[%c0_17, %c0_18, %c0_19], %26 {strides = array<i32>} : memref<1x1x8xf32, #tpu.memory_space<vmem>>, vector<1x1x8xf32>,
    } else {
    }
    return
  }
  func.func @transform_0(%arg0: i32, %arg1: i32) -> (i32, i32) {
    %c0_i32 = arith.constant 0 : i32
    return %arg0, %arg1 : i32, i32
  }
  func.func @transform_1(%arg0: i32, %arg1: i32) -> (i32, i32) {
    %c0_i32 = arith.constant 0 : i32
    return %arg0, %arg1 : i32, i32
  }
  func.func @transform_2(%arg0: i32, %arg1: i32) -> (i32, i32, i32) {
    %c0_i32 = arith.constant 0 : i32
    %c0_i32_0 = arith.constant 0 : i32
    %c0_i32_1 = arith.constant 0 : i32
    return %arg0, %c0_i32, %c0_i32_0 : i32, i32, i32
  }
}

</mosaic_0001>

<llo_original>
// kernel: tpu_custom_call.1
$region0: #{tpu_custom_call.1}
  #allocation0 [shape = 'u32[]', space=smem, size = 0x4, offset = 0x4, fixed_abs, tag = 'smem constant byte address 0x4 - core index']
  #allocation1 [shape = 'u32[144,128]{1,0:T(1,128)}', space=vmem, size = 0x12000, scoped, tag = 'internal scratch']
  %s0 = inlined_call_operand.hbm [shape: f32[8,256], index: 0, kind: input, shape index: {}]
  %s1 = inlined_call_operand.hbm [shape: f32[8,256], index: 1, kind: input, shape index: {}]
  %s2 = inlined_call_operand.hbm [shape: f32[1,1,8], index: 2, kind: output, shape index: {}]
  %s3 = sld [smem:[#allocation0]]
  $region34: #{tpu_custom_call.1} parent=0
    _
  %s5 = ssub.s32 1, %s3
  %s6 = scalar_select 0, %s5, %s3
  $region1: #{tpu_custom_call.1} parent=0
    #allocation2 [shape = 'u8[8192]{0}', space=vmem, size = 0x2000, scoped, tag = 'input window, operand 0, single buffered']
    #allocation3 [shape = 's32[1]{0}', space=sflag, size = 0x4, scoped, tag = 'scoped memory for tpu_custom_call.1']
    #allocation4 [shape = 's32[1]{0}', space=sflag, size = 0x4, scoped, tag = 'scoped memory for tpu_custom_call.1']
    #allocation5 [shape = 'u8[8192]{0}', space=vmem, size = 0x2000, scoped, tag = 'input window, operand 1, single buffered']
    #allocation6 [shape = 's32[1]{0}', space=sflag, size = 0x4, scoped, tag = 'scoped memory for tpu_custom_call.1']
    #allocation7 [shape = 'u8[512]{0}', space=vmem, size = 0x400, scoped, tag = 'output window, operand 0, single buffered']
    %7 = vsyncpa [#allocation3], 0
    %8 = vsyncpa [#allocation6], 0
    %9 = vsyncpa [#allocation4], 0
    // Predicated region
    $region2: #{tpu_custom_call.1} parent=1 // pred_check
      _
    $region3: #{tpu_custom_call.1} parent=1 // pred_check_branch
      %11 = sbr.rel (0) target = $region5
    $region4: #{tpu_custom_call.1} parent=1 // pred_region
      %s13 = ssub.s32 256, 256
      %14 = vsyncadd [#allocation3], %s13
      %s16 = sshll.u32 [#allocation2], 4
      %s17 = int_to_ptr.vmem [resolvable:$true] %s16
      %19 = dma.hbm_to_vmem [thread:$0]  %s0, 256, %s17, [#allocation3]
    $region5: #{tpu_custom_call.1} parent=1 // pred_fallthru
      _
    // Predicated region
    $region6: #{tpu_custom_call.1} parent=1 // pred_check
      _
    $region7: #{tpu_custom_call.1} parent=1 // pred_check_branch
      %21 = sbr.rel (0) target = $region9
    $region8: #{tpu_custom_call.1} parent=1 // pred_region
      %s23 = ssub.s32 256, 256
      %24 = vsyncadd [#allocation6], %s23
      %s26 = sshll.u32 [#allocation5], 4
      %s27 = int_to_ptr.vmem [resolvable:$true] %s26
      %29 = dma.hbm_to_vmem [thread:$0]  %s1, 256, %s27, [#allocation6]
    $region9: #{tpu_custom_call.1} parent=1 // pred_fallthru
      _
    // Predicated region
    $region10: #{tpu_custom_call.1} parent=1 // pred_check
      _
    $region11: #{tpu_custom_call.1} parent=1 // pred_check_branch
      %31 = sbr.rel (0) target = $region13
    $region12: #{tpu_custom_call.1} parent=1 // pred_region
      %32 = dma.done [#allocation3], 256
    $region13: #{tpu_custom_call.1} parent=1 // pred_fallthru
      _
    // Predicated region
    $region14: #{tpu_custom_call.1} parent=1 // pred_check
      _
    $region15: #{tpu_custom_call.1} parent=1 // pred_check_branch
      %34 = sbr.rel (0) target = $region17
    $region16: #{tpu_custom_call.1} parent=1 // pred_region
      %35 = dma.done [#allocation6], 256
    $region17: #{tpu_custom_call.1} parent=1 // pred_fallthru
      _
    %p36 = scmp.eq.s32.totalorder 0, 0
    // Predicated region
    $region18: #{tpu_custom_call.1} parent=1 // pred_check
      %p37 = pneg %p36
    $region19: #{tpu_custom_call.1} parent=1 // pred_check_branch
      %39 = sbr.rel (%p37) target = $region21
    $region20: #{tpu_custom_call.1} parent=1 // pred_region
      %vm40 = vcmask 57344
      %41 = vst.msk [vmem:[#allocation7] sm:$0x1] %vm40, 0.0
    $region21: #{tpu_custom_call.1} parent=1 // pred_fallthru
      _
    %v42 = vld [vmem:[#allocation2] sm:$0xff]
    %v43 = vld [vmem:[#allocation2 + $0x8] sm:$0xff]
    %v44 = vld [vmem:[#allocation5] sm:$0xff]
    %v45 = vld [vmem:[#allocation5 + $0x8] sm:$0xff]
    %v46 = vsub.f32 %v42, %v44
    %v47 = vsub.f32 %v43, %v45
    %v48 = vmul.f32 %v46, %v46
    %v49 = vmul.f32 %v47, %v47
    %v50 = vld [vmem:[#allocation7] sm:$0x1]
    %v51 = vadd.f32 %v48, %v49
    %52 = vadd.xlane.f32.xlu0 %v51
    %v53 = vpop.xlane.xlu0 %52
    %v55 = vlaneseq
    %v56 = vshrl.u32 %v55, 7
    %v57 = vsub.s32 0, %v56
    %v58 = vrot.slane %v53, %v57
    %v59 = vlaneseq
    %v60 = vshrl.u32 %v59, 7
    %v61 = vsub.s32 1, %v60
    %v62 = vrot.slane %v53, %v61
    %v63 = vlaneseq
    %v64 = vshrl.u32 %v63, 7
    %v65 = vsub.s32 2, %v64
    %v66 = vrot.slane %v53, %v65
    %v67 = vlaneseq
    %v68 = vshrl.u32 %v67, 7
    %v69 = vsub.s32 3, %v68
    %v70 = vrot.slane %v53, %v69
    %v71 = vlaneseq
    %v72 = vshrl.u32 %v71, 7
    %v73 = vsub.s32 4, %v72
    %v74 = vrot.slane %v53, %v73
    %v75 = vlaneseq
    %v76 = vshrl.u32 %v75, 7
    %v77 = vsub.s32 5, %v76
    %v78 = vrot.slane %v53, %v77
    %v79 = vlaneseq
    %v80 = vshrl.u32 %v79, 7
    %v81 = vsub.s32 6, %v80
    %v82 = vrot.slane %v53, %v81
    %v83 = vlaneseq
    %v84 = vshrl.u32 %v83, 7
    %v85 = vsub.s32 7, %v84
    %v86 = vrot.slane %v53, %v85
    %v87 = vcombine.low %v58, %v62
    %v88 = vcombine.low %v66, %v70
    %v89 = vcombine.low %v74, %v78
    %v90 = vcombine.low %v82, %v86
    %v92 = vunpack.c.l.s4 1966171168
    %v93 = vunpack.c.0.s8 %v92
    %v94 = vlaneseq
    %v95 = vshrl.u32 %v94, 7
    %v96 = vsub.s32 %v93, %v95
    %v97 = vrot.slane %v87, %v96
    %v99 = vunpack.c.l.s4 1966171168
    %v100 = vunpack.c.0.s8 %v99
    %v101 = vlaneseq
    %v102 = vshrl.u32 %v101, 7
    %v103 = vsub.s32 %v100, %v102
    %v104 = vrot.slane %v88, %v103
    %v106 = vunpack.c.l.s4 1966171168
    %v107 = vunpack.c.0.s8 %v106
    %v108 = vlaneseq
    %v109 = vshrl.u32 %v108, 7
    %v110 = vsub.s32 %v107, %v109
    %v111 = vrot.slane %v89, %v110
    %v113 = vunpack.c.l.s4 1966171168
    %v114 = vunpack.c.0.s8 %v113
    %v115 = vlaneseq
    %v116 = vshrl.u32 %v115, 7
    %v117 = vsub.s32 %v114, %v116
    %v118 = vrot.slane %v90, %v117
    %v119 = vcombine.low %v97, %v104
    %v120 = vcombine.low %v111, %v118
    %v122 = vunpack.c.l.s4 1966171168
    %v123 = vunpack.c.0.s8 %v122
    %v124 = vlaneseq
    %v125 = vshrl.u32 %v124, 7
    %v126 = vsub.s32 %v123, %v125
    %v127 = vrot.slane %v119, %v126
    %v129 = vunpack.c.l.s4 1966171168
    %v130 = vunpack.c.0.s8 %v129
    %v131 = vlaneseq
    %v132 = vshrl.u32 %v131, 7
    %v133 = vsub.s32 %v130, %v132
    %v134 = vrot.slane %v120, %v133
    %v135 = vcombine.low %v127, %v134
    %136 = vset.pattern.permute.xlu0 0
    %137 = vperm.xlu0 %136, %v135
    %v138 = vpop.permute.xlu0 %137
    %v139 = vlaneseq
    %v140 = vand.u32 %v139, 127
    %v141 = vlaneseq
    %v142 = vshrl.u32 %v141, 7
    %v143 = vsub.s32 %v140, %v142
    %v144 = vrot.slane %v138, %v143
    %v146 = vunpack.c.l.s4 1966171168
    %v147 = vunpack.c.0.s8 %v146
    %v148 = vlaneseq
    %v149 = vshrl.u32 %v148, 7
    %v150 = vsub.s32 %v147, %v149
    %v151 = vrot.slane %v144, %v150
    %v153 = vunpack.c.l.s4 1966171168
    %v154 = vunpack.c.0.s8 %v153
    %v155 = vlaneseq
    %v156 = vshrl.u32 %v155, 7
    %v157 = vsub.s32 %v154, %v156
    %v158 = vrot.slane %v151, %v157
    %v160 = vadd.f32 %v50, %v158
    %vm161 = vcmask 57344
    %162 = vst.msk [vmem:[#allocation7] sm:$0x1] %vm161, %v160
    // Predicated region
    $region22: #{tpu_custom_call.1} parent=1 // pred_check
      %p163 = pneg %p36
    $region23: #{tpu_custom_call.1} parent=1 // pred_check_branch
      %165 = sbr.rel (%p163) target = $region25
    $region24: #{tpu_custom_call.1} parent=1 // pred_region
      %v166 = vld [vmem:[#allocation7] sm:$0x1]
      %v167 = vmul.f32 %v166, 0.00390625
      %v168 = vadd.f32 %v167, 1e-06
      %v169 = vrsqrt.pop %v168
      %v170 = vmul.f32 %v168, %v169
      %vm171 = vcmp.eq.f32.partialorder %v168, inf
      %v172 = vsel %vm171, %v168, %v170
      %vm173 = vcmp.eq.f32.partialorder %v168, 0.0
      %v174 = vand.u32 %v168, 2147483648
      %v175 = vsel %vm173, %v174, %v172
      %176 = vst.msk [vmem:[#allocation7] sm:$0x1] %vm161, %v175
    $region25: #{tpu_custom_call.1} parent=1 // pred_fallthru
      _
    // Predicated region
    $region26: #{tpu_custom_call.1} parent=1 // pred_check
      _
    $region27: #{tpu_custom_call.1} parent=1 // pred_check_branch
      %178 = sbr.rel (0) target = $region29
    $region28: #{tpu_custom_call.1} parent=1 // pred_region
      %s180 = ssub.s32 16, 16
      %181 = vsyncadd [#allocation4], %s180
      %s183 = sshll.u32 [#allocation7], 4
      %s184 = int_to_ptr.vmem [resolvable:$true] %s183
      %186 = dma.vmem_to_hbm [thread:$0]  %s184, 16, %s2, [#allocation4]
    $region29: #{tpu_custom_call.1} parent=1 // pred_fallthru
      _
    // Predicated region
    $region30: #{tpu_custom_call.1} parent=1 // pred_check
      _
    $region31: #{tpu_custom_call.1} parent=1 // pred_check_branch
      %188 = sbr.rel (0) target = $region33
    $region32: #{tpu_custom_call.1} parent=1 // pred_region
      %189 = dma.done [#allocation4], 16
    $region33: #{tpu_custom_call.1} parent=1 // pred_fallthru
      _
    %190 = vsyncpa [#allocation3], 1
    %191 = vsyncpa [#allocation6], 1
    %192 = vsyncpa [#allocation4], 1

</llo_original>
